<compile_context>
chip_gen: v7x
topology: tpu7x:2x2x1
jax: 0.10.0
libtpu: 0.0.40
codegen_flags: <defaults>
</compile_context>

<pallas_src>
import jax
import jax.numpy as jnp
from jax.experimental import pallas as pl
from jax.experimental.pallas import tpu as pltpu


def _spatial_attention_kernel(w_ref, b_ref, x_ref, o_ref):
    # w_ref: SMEM (2,)  -- [w_avg / C, w_max]  (1/C already folded in on the host)
    # b_ref: SMEM (1,)  -- conv bias
    # x_ref: VMEM (BN, C, T) in the caller's dtype
    # o_ref: VMEM (BN, 1, T)
    x = x_ref[...]
    # Widening sum: accumulate the channel reduction in f32 without materializing an f32 copy
    # of the whole tile for the max path.
    ch_sum = jnp.sum(x, axis=1, keepdims=True, dtype=jnp.float32)        # (BN, 1, T)
    # Max is exact in the native dtype; only the (BN, 1, T) result is upcast.
    ch_max = jnp.max(x, axis=1, keepdims=True).astype(jnp.float32)       # (BN, 1, T)
    z = w_ref[0] * ch_sum + w_ref[1] * ch_max + b_ref[0]
    # Note: out-of-bounds lanes/rows of the last (padded) block compute sigmoid of unspecified
    # data; Pallas masks them on writeback, so this is safe -- never *read* those lanes here.
    o_ref[...] = jax.nn.sigmoid(z).astype(o_ref.dtype)                   # sigmoid -> EUP, ~free


def _chip_budgets():
    """(per-input-buffer budget bytes, scoped vmem_limit_bytes) tuned per chip generation."""
    try:
        kind = jax.devices()[0].device_kind.lower()
    except Exception:
        kind = ""
    if "v7" in kind or "7x" in kind:
        # 64 MiB physical VMEM per TC (32 MiB scoped default), ~2x per-TC HBM BW.
        return 8 * 1024 * 1024, 48 * 1024 * 1024
    if "v6" in kind:
        # 128 MiB physical VMEM; raise the 32 MiB scoped default so bigger blocks compile.
        return 12 * 1024 * 1024, 96 * 1024 * 1024
    if "v5" in kind:
        # 128 MiB physical VMEM but only a 16 MiB scoped default -> set it explicitly.
        return 4 * 1024 * 1024, 64 * 1024 * 1024
    # Unknown chip: conservative defaults.
    return 4 * 1024 * 1024, 64 * 1024 * 1024


def _pick_blocks(N, C, HW, itemsize, buf_budget):
    """Choose (batch_block, spatial_tile) so one input block is <= buf_budget."""
    per_image = C * HW * itemsize
    if per_image <= buf_budget:
        # Whole spatial extent fits: pack several images per block to amortize the per-step
        # overhead (this is the big win for small feature maps / late CBAM stages).
        bn = max(1, min(N, buf_budget // max(per_image, 1)))
        # Keep >= 2 grid steps so both v7x TensorCores get work ("parallel" sharding).
        if bn >= N and N >= 2:
            bn = pl.cdiv(N, 2)
        return bn, HW
    # One image per block; tile the spatial (lane) axis in multiples of 128.
    tile = (buf_budget // (C * itemsize)) // 128 * 128
    # TODO(synk): for extreme C (C*128*itemsize > budget) add a channel-chunked "arbitrary"
    # grid axis with a VMEM scratch accumulator instead of exceeding the budget here.
    tile = max(128, tile)
    return 1, min(tile, HW)


def spatial_attention(x, w, b, *, batch_block=None, tile_hw=None):
    """x: (N, C, H, W); w: (2,) 1x1-conv weights for [avg, max]; b: (1,) bias -> (N, 1, H, W)."""
    N, C, H, W = x.shape
    HW = H * W
    x_flat = x.reshape(N, C, HW)           # spatial -> 128-wide lanes, channels -> sublanes

    buf_budget, vmem_limit = _chip_budgets()
    auto_bn, auto_tile = _pick_blocks(N, C, HW, jnp.dtype(x.dtype).itemsize, buf_budget)
    bn = batch_block if batch_block is not None else auto_bn
    tile = tile_hw if tile_hw is not None else auto_tile

    grid = (pl.cdiv(N, bn), pl.cdiv(HW, tile))

    # Fold 1/C into the "avg" weight so the kernel only needs a channel sum (saves one
    # full-lane VPU multiply per tile and keeps the math in f32).
    w_scaled = jnp.stack([w[0] / jnp.float32(C), w[1]]).astype(jnp.float32)
    b_f32 = b.astype(jnp.float32)

    out_flat = pl.pallas_call(
        _spatial_attention_kernel,
        out_shape=jax.ShapeDtypeStruct((N, 1, HW), x.dtype),
        grid=grid,
        in_specs=[
            pl.BlockSpec(memory_space=pltpu.MemorySpace.SMEM),            # w (scalars)
            pl.BlockSpec(memory_space=pltpu.MemorySpace.SMEM),            # b (scalar)
            pl.BlockSpec((bn, C, tile), lambda nb, s: (nb, 0, s)),        # x block
        ],
        out_specs=pl.BlockSpec((bn, 1, tile), lambda nb, s: (nb, 0, s)),
        compiler_params=pltpu.CompilerParams(
            # Batch blocks and spatial tiles are independent -> shard across both v7x TCs.
            dimension_semantics=("parallel", "parallel"),
            vmem_limit_bytes=vmem_limit,
        ),
    )(w_scaled, b_f32, x_flat)

    return out_flat.reshape(N, 1, H, W)
    # TODO(synk): if the caller immediately computes x * attention (standard CBAM usage),
    # fuse that multiply here as a second (bn, C, tile) output to avoid re-reading x from HBM.


def _reference(x, w, b):
    avg = jnp.mean(x.astype(jnp.float32), axis=1, keepdims=True)
    mx = jnp.max(x.astype(jnp.float32), axis=1, keepdims=True)
    z = w[0] * avg + w[1] * mx + b[0]
    return jax.nn.sigmoid(z).astype(x.dtype)


if __name__ == "__main__":
    key = jax.random.PRNGKey(0)
    k_x, k_w, k_b = jax.random.split(key, 3)

    # Conv2d(2, 1, kernel_size=1) parameters, PyTorch-style uniform init (fan_in = 2).
    bound = 1.0 / jnp.sqrt(2.0)
    w = jax.random.uniform(k_w, (2,), minval=-bound, maxval=bound, dtype=jnp.float32)
    b = jax.random.uniform(k_b, (1,), minval=-bound, maxval=bound, dtype=jnp.float32)

    # Main case: f32, small CBAM-like shape.
    N, C, H, W = 2, 4, 16, 16
    x = jax.random.normal(k_x, (N, C, H, W), dtype=jnp.float32)
    out = jax.block_until_ready(spatial_attention(x, w, b))
    ref = _reference(x, w, b)
    assert out.shape == (N, 1, H, W), out.shape
    assert jnp.allclose(out, ref, atol=1e-5, rtol=1e-5), float(jnp.max(jnp.abs(out - ref)))

    # bf16 end-to-end (halved HBM bytes); generous tolerance for bf16 output rounding.
    x_bf16 = x.astype(jnp.bfloat16)
    out_bf16 = jax.block_until_ready(spatial_attention(x_bf16, w, b))
    ref_bf16 = _reference(x_bf16, w, b)
    assert out_bf16.dtype == jnp.bfloat16
    assert jnp.allclose(out_bf16.astype(jnp.float32), ref_bf16.astype(jnp.float32),
                        atol=2e-2, rtol=2e-2)

    # Exercise multi-image blocks with a padded last batch block.
    x3 = jax.random.normal(k_x, (3, 4, 8, 8), dtype=jnp.float32)
    out3 = jax.block_until_ready(spatial_attention(x3, w, b, batch_block=2))
    ref3 = _reference(x3, w, b)
    assert jnp.allclose(out3, ref3, atol=1e-5, rtol=1e-5)

    print("KERNEL_OK")
</pallas_src>

<mosaic_0001>
module attributes {stable_mosaic.version = 11 : i64} {
  func.func @_spatial_attention_kernel(%arg0: i32, %arg1: i32, %arg2: memref<2xf32, #tpu.memory_space<smem>>, %arg3: memref<1xf32, #tpu.memory_space<smem>>, %arg4: memref<1x4x256xf32, #tpu.memory_space<vmem>>, %arg5: memref<1x1x256xf32, #tpu.memory_space<vmem>>) attributes {dimension_semantics = [#tpu.dimension_semantics<parallel>, #tpu.dimension_semantics<parallel>], iteration_bounds = array<i64: 2, 1>, scalar_prefetch = 0 : i64, scratch_operands = 0 : i64, tpu.core_type = #tpu.core_type<tc>, window_params = [{transform_indices = @transform_0, window_bounds = array<i64: 2>}, {transform_indices = @transform_1, window_bounds = array<i64: 1>}, {transform_indices = @transform_2, window_bounds = array<i64: 1, 4, 256>}, {transform_indices = @transform_3, window_bounds = array<i64: 1, 1, 256>}]} {
    %c0 = arith.constant 0 : index
    %c0_0 = arith.constant 0 : index
    %c0_1 = arith.constant 0 : index
    %0 = vector.load %arg4[%c0, %c0_0, %c0_1] : memref<1x4x256xf32, #tpu.memory_space<vmem>>, vector<1x4x256xf32>
    %cst = arith.constant dense<0.000000e+00> : vector<1x256xf32>
    %1 = vector.multi_reduction <add>, %0, %cst [1] : vector<1x4x256xf32> to vector<1x256xf32>
    %2 = vector.shape_cast %1 : vector<1x256xf32> to vector<1x1x256xf32>
    %cst_2 = arith.constant dense<0xFF800000> : vector<1x256xf32>
    %3 = vector.multi_reduction <maximumf>, %0, %cst_2 [1] : vector<1x4x256xf32> to vector<1x256xf32>
    %4 = vector.shape_cast %3 : vector<1x256xf32> to vector<1x1x256xf32>
    %c0_3 = arith.constant 0 : index
    %5 = memref.load %arg2[%c0_3] : memref<2xf32, #tpu.memory_space<smem>>
    %6 = vector.broadcast %5 : f32 to vector<1x1x256xf32>
    %7 = arith.mulf %6, %2 : vector<1x1x256xf32>
    %c1 = arith.constant 1 : index
    %8 = memref.load %arg2[%c1] : memref<2xf32, #tpu.memory_space<smem>>
    %9 = vector.broadcast %8 : f32 to vector<1x1x256xf32>
    %10 = arith.mulf %9, %4 : vector<1x1x256xf32>
    %11 = arith.addf %7, %10 : vector<1x1x256xf32>
    %c0_4 = arith.constant 0 : index
    %12 = memref.load %arg3[%c0_4] : memref<1xf32, #tpu.memory_space<smem>>
    %13 = vector.broadcast %12 : f32 to vector<1x1x256xf32>
    %14 = arith.addf %11, %13 : vector<1x1x256xf32>
    %15 = arith.negf %14 : vector<1x1x256xf32>
    %16 = math.exp %15 : vector<1x1x256xf32>
    %cst_5 = arith.constant 1.000000e+00 : f32
    %17 = vector.broadcast %cst_5 : f32 to vector<1x1x256xf32>
    %18 = arith.addf %17, %16 : vector<1x1x256xf32>
    %19 = arith.divf %17, %18 : vector<1x1x256xf32>
    %c0_6 = arith.constant 0 : index
    %c0_7 = arith.constant 0 : index
    %c0_8 = arith.constant 0 : index
    %20 = vector.load %arg5[%c0_6, %c0_7, %c0_8] : memref<1x1x256xf32, #tpu.memory_space<vmem>>, vector<1x1x256xf32>
    tpu.vector_store %arg5[%c0_6, %c0_7, %c0_8], %19 {strides = array<i32>} : memref<1x1x256xf32, #tpu.memory_space<vmem>>, vector<1x1x256xf32>,
    return
  }
  func.func @transform_0(%arg0: i32, %arg1: i32) -> i32 {
    %c0_i32 = arith.constant 0 : i32
    %c0_i32_0 = arith.constant 0 : i32
    return %c0_i32 : i32
  }
  func.func @transform_1(%arg0: i32, %arg1: i32) -> i32 {
    %c0_i32 = arith.constant 0 : i32
    %c0_i32_0 = arith.constant 0 : i32
    return %c0_i32 : i32
  }
  func.func @transform_2(%arg0: i32, %arg1: i32) -> (i32, i32, i32) {
    %c0_i32 = arith.constant 0 : i32
    %c0_i32_0 = arith.constant 0 : i32
    return %arg0, %c0_i32, %arg1 : i32, i32, i32
  }
  func.func @transform_3(%arg0: i32, %arg1: i32) -> (i32, i32, i32) {
    %c0_i32 = arith.constant 0 : i32
    %c0_i32_0 = arith.constant 0 : i32
    return %arg0, %c0_i32, %arg1 : i32, i32, i32
  }
}

</mosaic_0001>

<llo_original>
// kernel: tpu_custom_call.1
$region0: #{tpu_custom_call.1}
  #allocation0 [shape = 'u32[]', space=smem, size = 0x4, offset = 0x4, fixed_abs, tag = 'smem constant byte address 0x4 - core index']
  #allocation1 [shape = 'u32[144,128]{1,0:T(1,128)}', space=vmem, size = 0x12000, scoped, tag = 'internal scratch']
  #allocation2 [shape = 'f32[1]{0:T(128)S(6)}', space=smem, size = 0x200, scoped, tag = 'scoped memory for tpu_custom_call.1']
  %s0 = inlined_call_operand.hbm [shape: f32[2], index: 0, kind: input, shape index: {}]
  %s1 = inlined_call_operand.<no memory space> [shape: f32[1], index: 1, kind: input, shape index: {}]
  %s2 = inlined_call_operand.hbm [shape: f32[2,4,256], index: 2, kind: input, shape index: {}]
  %s3 = inlined_call_operand.hbm [shape: f32[2,1,256], index: 3, kind: output, shape index: {}]
  %s4 = sld [smem:[#allocation0]]
  $region53: #{tpu_custom_call.1} parent=0
    _
  %s6 = ssub.s32 1, %s4
  %s7 = scalar_select 0, %s6, %s4
  %8 = sst [smem:[#allocation2]] %s1
  $region1: #{tpu_custom_call.1} parent=0
    #allocation3 [shape = 'u8[512]{0}', space=smem, size = 0x200, scoped, tag = 'input window, operand 0, single buffered']
    #allocation4 [shape = 's32[2]{0}', space=sflag, size = 0x8, scoped, tag = 'scoped memory for tpu_custom_call.1']
    #allocation5 [shape = 's32[2]{0}', space=sflag, size = 0x8, scoped, tag = 'scoped memory for tpu_custom_call.1']
    #allocation6 [shape = 's32[2]{0}', space=sflag, size = 0x8, scoped, tag = 'scoped memory for tpu_custom_call.1']
    #allocation7 [shape = 'u8[8192]{0}', space=vmem, size = 0x2000, scoped, tag = 'input window, operand 2']
    #allocation8 [shape = 'u8[2048]{0}', space=vmem, size = 0x800, scoped, tag = 'output window, operand 0']
    %9 = vsyncpa [#allocation6], 0
    %10 = vsyncpa [#allocation4], 0
    %s11 = scalar_lea.sflag [#allocation4], 1
    %12 = vsyncpa %s11, 0
    %13 = vsyncpa [#allocation5], 0
    %s14 = scalar_lea.sflag [#allocation5], 1
    %15 = vsyncpa %s14, 0
    loop: start=0, step=1, limit=4
    $region2: #{tpu_custom_call.1} parent=1 // loop_pre_header
      _
    $region3: #{tpu_custom_call.1} parent=1 // loop_header
      %s17 = sphi 0, %s21
      %p18 = scmp.ge.s32.totalorder %s17, 4
      %s24 = sphi 0, %s36
      %s25 = sphi 0, %s32
      %s26 = sphi 0, %s24
      %s27 = sphi 0, %s25
      %s28 = sphi 0, %s26
      %s29 = sphi 0, %s27
      %s37 = sphi 0, %s37
      %s39 = sphi 0, %s37
      %s40 = sphi 0, %s39
      %s54 = sphi 0, %s40
      %s58 = sphi 0, %s58
      %s60 = sphi 0, %s58
      %s61 = sphi 0, %s60
      %s75 = sphi 0, %s61
      %s83 = sphi 0, %s85
      %s86 = sphi 0, %s83
      %s87 = sphi 0, %s86
      %s103 = sphi 0, %s87
      %s111 = sphi 0, %s113
      %s114 = sphi 0, %s111
      %s115 = sphi 0, %s114
      %s131 = sphi 0, %s115
    $region4: #{tpu_custom_call.1} parent=1 // loop_header_branch
      %20 = sbr.rel (%p18) target = $region8
    $region5: #{tpu_custom_call.1} parent=1 // loop_body
      %s22 = ssub.s32 %s17, 1
      %s23 = ssub.s32 %s17, 2
      %s30 = sadd.s32 1, %s25
      %p31 = scmp.ge.s32.totalorder %s30, 1
      %s32 = scalar_select %p31, 0, %s30
      %s33 = sadd.s32 1, %s24
      %s34 = scalar_select %p31, %s33, %s24
      %p35 = scmp.ge.s32.totalorder %s34, 2
      %s36 = scalar_select %p35, 0, %s34
      %s38 = sadd.s32 %s37, 1
      %p41 = scmp.eq.s32.totalorder %s17, 1
      %p42 = scmp.ne.s32.totalorder %s37, %s39
      %p43 = scmp.eq.s32.totalorder %s17, 0
      %p44 = por %p42, %p43
      %p45 = scmp.ne.s32.totalorder %s37, %s39
      %p46 = scmp.eq.s32.totalorder %s22, 1
      %p47 = por %p45, %p46
      %p48 = scmp.ne.s32.totalorder %s39, %s40
      %p49 = scmp.eq.s32.totalorder %s22, 0
      %p50 = por %p48, %p49
      %p51 = scmp.ne.s32.totalorder %s39, %s40
      %p52 = scmp.eq.s32.totalorder %s23, 1
      %p53 = por %p51, %p52
      %p55 = scmp.ne.s32.totalorder %s40, %s54
      %p56 = scmp.eq.s32.totalorder %s23, 0
      %p57 = por %p55, %p56
      %s59 = sadd.s32 %s58, 1
      %p62 = scmp.eq.s32.totalorder %s17, 1
      %p63 = scmp.ne.s32.totalorder %s58, %s60
      %p64 = scmp.eq.s32.totalorder %s17, 0
      %p65 = por %p63, %p64
      %p66 = scmp.ne.s32.totalorder %s58, %s60
      %p67 = scmp.eq.s32.totalorder %s22, 1
      %p68 = por %p66, %p67
      %p69 = scmp.ne.s32.totalorder %s60, %s61
      %p70 = scmp.eq.s32.totalorder %s22, 0
      %p71 = por %p69, %p70
      %p72 = scmp.ne.s32.totalorder %s60, %s61
      %p73 = scmp.eq.s32.totalorder %s23, 1
      %p74 = por %p72, %p73
      %p76 = scmp.ne.s32.totalorder %s61, %s75
      %p77 = scmp.eq.s32.totalorder %s23, 0
      %p78 = por %p76, %p77
      %s79 = ssub.s32 %s24, %s36
      %s80 = ssub.s32 %s25, %s32
      %s81 = sor.u32 %s79, %s80
      %p82 = scmp.eq.s32.totalorder %s81, 0
      %s84 = sadd.s32 %s83, 1
      %s85 = scalar_select %p82, %s83, %s84
      %p88 = pneg %p82
      %p89 = scmp.eq.s32.totalorder %s17, 1
      %p90 = por %p88, %p89
      %p91 = scmp.ne.s32.totalorder %s83, %s86
      %p92 = scmp.eq.s32.totalorder %s17, 0
      %p93 = por %p91, %p92
      %p94 = scmp.ne.s32.totalorder %s83, %s86
      %p95 = scmp.eq.s32.totalorder %s22, 1
      %p96 = por %p94, %p95
      %p97 = scmp.ne.s32.totalorder %s86, %s87
      %p98 = scmp.eq.s32.totalorder %s22, 0
      %p99 = por %p97, %p98
      %p100 = scmp.ne.s32.totalorder %s86, %s87
      %p101 = scmp.eq.s32.totalorder %s23, 1
      %p102 = por %p100, %p101
      %p104 = scmp.ne.s32.totalorder %s87, %s103
      %p105 = scmp.eq.s32.totalorder %s23, 0
      %p106 = por %p104, %p105
      %s107 = ssub.s32 %s24, %s36
      %s108 = ssub.s32 %s25, %s32
      %s109 = sor.u32 %s107, %s108
      %p110 = scmp.eq.s32.totalorder %s109, 0
      %s112 = sadd.s32 %s111, 1
      %s113 = scalar_select %p110, %s111, %s112
      %p116 = pneg %p110
      %p117 = scmp.eq.s32.totalorder %s17, 1
      %p118 = por %p116, %p117
      %p119 = scmp.ne.s32.totalorder %s111, %s114
      %p120 = scmp.eq.s32.totalorder %s17, 0
      %p121 = por %p119, %p120
      %p122 = scmp.ne.s32.totalorder %s111, %s114
      %p123 = scmp.eq.s32.totalorder %s22, 1
      %p124 = por %p122, %p123
      %p125 = scmp.ne.s32.totalorder %s114, %s115
      %p126 = scmp.eq.s32.totalorder %s22, 0
      %p127 = por %p125, %p126
      %p128 = scmp.ne.s32.totalorder %s114, %s115
      %p129 = scmp.eq.s32.totalorder %s23, 1
      %p130 = por %p128, %p129
      %p132 = scmp.ne.s32.totalorder %s115, %s131
      %p133 = scmp.eq.s32.totalorder %s23, 0
      %p134 = por %p132, %p133
      %p135 = scmp.le.s32.totalorder 1, %s17
      %p136 = scmp.lt.s32.totalorder %s17, 3
      %p137 = pnand %p135, %p136
      %p138 = pneg %p137
      // Predicated region
      $region9: #{tpu_custom_call.1} parent=5 // pred_check
        _
      $region10: #{tpu_custom_call.1} parent=5 // pred_check_branch
        %140 = sbr.rel (%p137) target = $region12
      $region11: #{tpu_custom_call.1} parent=5 // pred_region
        %s141 = ssub.s32 %s17, 1
        // Predicated region
        $region13: #{tpu_custom_call.1} parent=11 // pred_check
          %p142 = pneg %p50
        $region14: #{tpu_custom_call.1} parent=11 // pred_check_branch
          %144 = sbr.rel (%p142) target = $region16
        $region15: #{tpu_custom_call.1} parent=11 // pred_region
          %s146 = ssub.s32 16, 16
          %147 = vsyncadd [#allocation6], %s146
          %150 = dma.hbm_to_smem %s0, 16, [#allocation3], [#allocation6]
        $region16: #{tpu_custom_call.1} parent=11 // pred_fallthru
          _
        // Predicated region
        $region17: #{tpu_custom_call.1} parent=11 // pred_check
          %p151 = pneg %p71
        $region18: #{tpu_custom_call.1} parent=11 // pred_check_branch
          %153 = sbr.rel (%p151) target = $region20
        $region19: #{tpu_custom_call.1} parent=11 // pred_region
          _
        $region20: #{tpu_custom_call.1} parent=11 // pred_fallthru
          _
      $region12: #{tpu_custom_call.1} parent=5 // pred_fallthru
        _
      %p154 = scmp.lt.s32.totalorder %s17, 2
      // Predicated region
      $region21: #{tpu_custom_call.1} parent=5 // pred_check
        %p155 = pneg %p154
      $region22: #{tpu_custom_call.1} parent=5 // pred_check_branch
        %157 = sbr.rel (%p155) target = $region24
      $region23: #{tpu_custom_call.1} parent=5 // pred_region
        // Predicated region
        $region25: #{tpu_custom_call.1} parent=23 // pred_check
          %p158 = pneg %p93
        $region26: #{tpu_custom_call.1} parent=23 // pred_check_branch
          %160 = sbr.rel (%p158) target = $region28
        $region27: #{tpu_custom_call.1} parent=23 // pred_region
          %s161 = sand.u32 %s83, 1
          %s162 = scalar_lea.sflag [#allocation4], %s161
          %s163 = sand.u32 %s83, 1
          %s164 = smul.addr %s163, 8
          %s165 = scalar_lea.vmem [#allocation7], %s164
          %s166 = smul.u32 2, %s25
          %s168 = ssub.s32 128, 128
          %169 = vsyncadd %s162, %s168
          %s170 = smul.addr %s24, 2
          %s171 = sadd.s32 %s166, %s170
          %s172 = smul.addr %s171, 64
          %s173 = scalar_lea.hbm %s2, %s172
          %s175 = sshll.u32 %s165, 4
          %s176 = int_to_ptr.vmem [resolvable:$true] %s175
          %178 = dma.hbm_to_vmem [thread:$0]  %s173, 128, %s176, %s162
        $region28: #{tpu_custom_call.1} parent=23 // pred_fallthru
          _
      $region24: #{tpu_custom_call.1} parent=5 // pred_fallthru
        _
      %p179 = scmp.le.s32.totalorder 1, %s17
      %p180 = scmp.lt.s32.totalorder %s17, 3
      %p181 = pnand %p179, %p180
      %p182 = pneg %p181
      // Predicated region
      $region29: #{tpu_custom_call.1} parent=5 // pred_check
        _
      $region30: #{tpu_custom_call.1} parent=5 // pred_check_branch
        %184 = sbr.rel (%p181) target = $region32
      $region31: #{tpu_custom_call.1} parent=5 // pred_region
        %s185 = ssub.s32 %s17, 1
        // Predicated region
        $region33: #{tpu_custom_call.1} parent=31 // pred_check
          %p186 = pneg %p50
        $region34: #{tpu_custom_call.1} parent=31 // pred_check_branch
          %188 = sbr.rel (%p186) target = $region36
        $region35: #{tpu_custom_call.1} parent=31 // pred_region
          %189 = dma.done [#allocation6], 16
        $region36: #{tpu_custom_call.1} parent=31 // pred_fallthru
          _
        %s190 = sand.u32 %s86, 1
        %s191 = scalar_lea.sflag [#allocation4], %s190
        %s192 = sand.u32 %s86, 1
        %s193 = smul.addr %s192, 8
        %s194 = scalar_lea.vmem [#allocation7], %s193
        // Predicated region
        $region37: #{tpu_custom_call.1} parent=31 // pred_check
          %p195 = pneg %p99
        $region38: #{tpu_custom_call.1} parent=31 // pred_check_branch
          %197 = sbr.rel (%p195) target = $region40
        $region39: #{tpu_custom_call.1} parent=31 // pred_region
          %198 = dma.done %s191, 128
        $region40: #{tpu_custom_call.1} parent=31 // pred_fallthru
          _
        %199 = sfence
        %p200 = pneg %p50
        %p201 = pneg %p47
        %p202 = pneg %p71
        %p203 = pneg %p68
        %s204 = sand.u32 %s86, 1
        %s205 = scalar_lea.sflag [#allocation4], %s204
        %s206 = sand.u32 %s86, 1
        %s207 = smul.addr %s206, 8
        %s208 = scalar_lea.vmem [#allocation7], %s207
        %p209 = pneg %p99
        %p210 = pneg %p96
        %p211 = pneg %p127
        %p212 = pneg %p124
        %s213 = sand.u32 %s114, 1
        %s214 = scalar_lea.sflag [#allocation5], %s213
        %s215 = sand.u32 %s114, 1
        %s216 = smul.addr %s215, 2
        %s217 = scalar_lea.vmem [#allocation8], %s216
        %s218 = smul.u32 2, %s27
        %s219 = smul.u32 2, %s27
        %v220 = vld [vmem:[%s194] sm:$0xff]
        %v222 = vcombine.high %v220, %v220
        %vm224 = vcmask 1043456
        %v225 = vsel %vm224, %v220, 0.0
        %v226 = vrot.slane %v225, 4
        %v227 = vadd.f32 %v225, %v226
        %v228 = vrot.slane %v227, 2
        %v229 = vadd.f32 %v227, %v228
        %v230 = vrot.slane %v229, 1
        %v231 = vadd.f32 %v229, %v230
        %v232 = vsel %vm224, %v222, 0.0
        %v233 = vrot.slane %v232, 4
        %v234 = vadd.f32 %v232, %v233
        %v235 = vrot.slane %v234, 2
        %v236 = vadd.f32 %v234, %v235
        %v237 = vrot.slane %v236, 1
        %v238 = vadd.f32 %v236, %v237
        %v239 = vsel %vm224, %v220, -inf
        %v240 = vrot.slane %v239, 4
        %v241 = vmax.f32 %v239, %v240
        %v242 = vrot.slane %v241, 2
        %v243 = vmax.f32 %v241, %v242
        %v244 = vrot.slane %v243, 1
        %v245 = vmax.f32 %v243, %v244
        %v246 = vsel %vm224, %v222, -inf
        %v247 = vrot.slane %v246, 4
        %v248 = vmax.f32 %v246, %v247
        %v249 = vrot.slane %v248, 2
        %v250 = vmax.f32 %v248, %v249
        %v251 = vrot.slane %v250, 1
        %v252 = vmax.f32 %v250, %v251
        %s253 = sld [smem:[#allocation3]]
        %v254 = vstv %s253
        %v255 = vmul.f32 %v254, %v231
        %v256 = vmul.f32 %v254, %v238
        %s257 = sld [smem:[#allocation3 + $0x1]]
        %v258 = vstv %s257
        %v259 = vmul.f32 %v258, %v245
        %v260 = vmul.f32 %v258, %v252
        %v261 = vadd.f32 %v255, %v259
        %v262 = vadd.f32 %v256, %v260
        %s263 = sld [smem:[#allocation2]]
        %v264 = vstv %s263
        %v265 = vadd.f32 %v261, %v264
        %v266 = vadd.f32 %v262, %v264
        %v267 = vxor.u32 %v265, 2147483648
        %v268 = vxor.u32 %v266, 2147483648
        %v269 = vmul.f32 %v267, 1.442695
        %v270 = vpow.pop %v269
        %v271 = vmul.f32 %v268, 1.442695
        %v272 = vpow.pop %v271
        %v273 = vadd.f32 %v270, 1.0
        %v274 = vadd.f32 %v272, 1.0
        %v275 = vrcp.pop %v273
        %v276 = vmul.f32 1.0, %v275
        %v277 = vrcp.pop %v274
        %v278 = vmul.f32 1.0, %v277
        %v281 = vcombine.low %v276, %v278
        %v283 = vunpack.c.l.s4 1966171168
        %v284 = vunpack.c.0.s8 %v283
        %v285 = vlaneseq
        %v286 = vshrl.u32 %v285, 7
        %v287 = vsub.s32 %v284, %v286
        %v288 = vrot.slane %v281, %v287
        %v290 = vunpack.c.l.s4 1966171168
        %v291 = vunpack.c.0.s8 %v290
        %v292 = vlaneseq
        %v293 = vshrl.u32 %v292, 7
        %v294 = vsub.s32 %v291, %v293
        %v295 = vrot.slane %v288, %v294
        %v297 = vlaneseq
        %vm298 = vcmp.ge.s32.totalorder %v297, 0
        %vm299 = vcmp.lt.s32.totalorder %v297, 256
        %vm300 = vmand %vm298, %vm299
        %301 = vst.msk [vmem:[%s217] sm:$0x3] %vm300, %v295
        %s302 = sand.u32 %s114, 1
        %s303 = scalar_lea.sflag [#allocation5], %s302
        %s304 = sand.u32 %s114, 1
        %s305 = smul.addr %s304, 2
        %s306 = scalar_lea.vmem [#allocation8], %s305
        // Predicated region
        $region41: #{tpu_custom_call.1} parent=31 // pred_check
          %p307 = pneg %p124
        $region42: #{tpu_custom_call.1} parent=31 // pred_check_branch
          %309 = sbr.rel (%p307) target = $region44
        $region43: #{tpu_custom_call.1} parent=31 // pred_region
          %s310 = smul.u32 2, %s27
          %s312 = ssub.s32 32, 32
          %313 = vsyncadd %s303, %s312
          %s314 = smul.addr %s26, 2
          %s315 = sadd.s32 %s310, %s314
          %s316 = smul.addr %s315, 16
          %s317 = scalar_lea.hbm %s3, %s316
          %s319 = sshll.u32 %s306, 4
          %s320 = int_to_ptr.vmem [resolvable:$true] %s319
          %322 = dma.vmem_to_hbm [thread:$0]  %s320, 32, %s317, %s303
        $region44: #{tpu_custom_call.1} parent=31 // pred_fallthru
          _
      $region32: #{tpu_custom_call.1} parent=5 // pred_fallthru
        _
      %p323 = scmp.le.s32.totalorder 2, %s17
      // Predicated region
      $region45: #{tpu_custom_call.1} parent=5 // pred_check
        %p324 = pneg %p323
      $region46: #{tpu_custom_call.1} parent=5 // pred_check_branch
        %326 = sbr.rel (%p324) target = $region48
      $region47: #{tpu_custom_call.1} parent=5 // pred_region
        %s327 = ssub.s32 %s17, 2
        // Predicated region
        $region49: #{tpu_custom_call.1} parent=47 // pred_check
          %p328 = pneg %p130
        $region50: #{tpu_custom_call.1} parent=47 // pred_check_branch
          %330 = sbr.rel (%p328) target = $region52
        $region51: #{tpu_custom_call.1} parent=47 // pred_region
          %s331 = sand.u32 %s115, 1
          %s332 = scalar_lea.sflag [#allocation5], %s331
          %s333 = sand.u32 %s115, 1
          %s334 = smul.addr %s333, 2
          %s335 = scalar_lea.vmem [#allocation8], %s334
          %336 = dma.done %s332, 32
        $region52: #{tpu_custom_call.1} parent=47 // pred_fallthru
          _
      $region48: #{tpu_custom_call.1} parent=5 // pred_fallthru
        _
    $region6: #{tpu_custom_call.1} parent=1 // loop_footer
      %s21 = sadd.s32 1, %s17
    $region7: #{tpu_custom_call.1} parent=1 // loop_footer_branch
      %16 = sbr.rel target = $region3
    $region8: #{tpu_custom_call.1} parent=1 // loop_exit
      _
    %337 = vsyncpa [#allocation4], 1
    %s338 = scalar_lea.sflag [#allocation4], 1
    %339 = vsyncpa %s338, 1
    %340 = vsyncpa [#allocation5], 1
    %s341 = scalar_lea.sflag [#allocation5], 1
    %342 = vsyncpa %s341, 1
    %343 = vsyncpa [#allocation6], 1
    %s344 = scalar_lea.sflag [#allocation6], 1
    %345 = vsyncpa %s344, 1

</llo_original>
